<compile_context>
chip_gen: v7x
topology: tpu7x:2x2x1
jax: 0.10.0
libtpu: 0.0.40
codegen_flags: <defaults>
</compile_context>

<pallas_src>
from functools import partial

import jax
import jax.numpy as jnp
from jax.experimental import pallas as pl
from jax.experimental.pallas import tpu as pltpu


def _sigmoid(v):
    # exp + divide: guaranteed Mosaic lowering (EUP exp, VPU/EUP divide).
    return 1.0 / (1.0 + jnp.exp(-v))


def _yolo_detection_kernel(x_ref, out_ref, *, stride, grid_size, gg_tile, anchors):
    """One (batch, anchor, GG-tile) block.

    x_ref:   VMEM (C5, gg_tile) raw network output, lane axis = flattened G*G.
    out_ref: VMEM (C5, gg_tile) f32, lane-dense:
        row 0 = (sigmoid(tx) + cx) * stride
        row 1 = (sigmoid(ty) + cy) * stride
        row 2 = exp(tw) * anchor_w
        row 3 = exp(th) * anchor_h
        row 4 = sigmoid(conf)
        rows 5: = sigmoid(cls)
    """
    a_idx = pl.program_id(1)   # anchor index (grid axis 1)
    t_idx = pl.program_id(2)   # GG-tile index (grid axis 2)

    # Compile-time anchors, selected by a scalar where-chain on the anchor axis.
    aw = jnp.float32(anchors[0][0])
    ah = jnp.float32(anchors[0][1])
    for i in range(1, len(anchors)):
        sel = a_idx == i
        aw = jnp.where(sel, jnp.float32(anchors[i][0]), aw)
        ah = jnp.where(sel, jnp.float32(anchors[i][1]), ah)

    # Grid-cell offsets from an in-kernel iota (no HBM input, no per-step DMA).
    lane = jax.lax.broadcasted_iota(jnp.int32, (1, gg_tile), 1).astype(jnp.float32)
    idx = lane + jnp.float32(gg_tile) * t_idx.astype(jnp.float32)  # global flat idx
    # Float-safe idx // G and idx % G (all values are exact small ints in f32;
    # the +0.5 keeps floor on the correct side of integer boundaries).
    cy = jnp.floor((idx + 0.5) * (1.0 / grid_size))
    cx = idx - cy * jnp.float32(grid_size)

    # xy: sigmoid only where needed (rows 0:2), stored straight at row offsets.
    s_xy = _sigmoid(x_ref[0:2, :].astype(jnp.float32))             # (2, gg_tile)
    out_ref[0:1, :] = (s_xy[0:1, :] + cx) * stride
    out_ref[1:2, :] = (s_xy[1:2, :] + cy) * stride

    # wh: exp only (no wasted sigmoid), scaled by the compile-time raw anchor
    # (the /stride ... *stride round trip of the reference cancels).
    e_wh = jnp.exp(x_ref[2:4, :].astype(jnp.float32))               # (2, gg_tile)
    out_ref[2:3, :] = e_wh[0:1, :] * aw
    out_ref[3:4, :] = e_wh[1:2, :] * ah

    # conf + class scores.
    out_ref[4:, :] = _sigmoid(x_ref[4:, :].astype(jnp.float32))


def _pick_gg_tile(gg):
    """Lane-axis tile: multiple of 128 when possible, else the full extent."""
    if gg <= 512:
        return gg                       # full dim is always a legal block extent
    for t in (512, 256, 128):
        if gg % t == 0:
            return t
    return 512                          # ragged last tile; Pallas masks OOB lanes


def yolo_detection_forward(x, anchors, image_size, num_classes):
    """Equivalent of YOLODetection.forward(x, targets=None) -> (output, 0)."""
    B, C, G, G2 = x.shape
    assert G == G2
    A = len(anchors)
    C5 = num_classes + 5
    assert C == A * C5, "channel dim must equal num_anchors * (num_classes + 5)"
    GG = G * G
    stride = float(image_size) / float(G)

    # Free metadata reshape: (B, A*C5, G, G) -> (B, A, C5, G*G). No dtype cast.
    x4 = x.reshape(B, A, C5, GG)

    gg_tile = _pick_gg_tile(GG)
    num_t = -(-GG // gg_tile)

    kernel = partial(
        _yolo_detection_kernel,
        stride=stride,
        grid_size=G,
        gg_tile=gg_tile,
        anchors=tuple((float(w), float(h)) for (w, h) in anchors),
    )

    out = pl.pallas_call(
        kernel,
        out_shape=jax.ShapeDtypeStruct((B, A, C5, GG), jnp.float32),
        grid=(B, A, num_t),
        in_specs=[
            pl.BlockSpec((None, None, C5, gg_tile), lambda b, a, t: (b, a, 0, t)),
        ],
        out_specs=pl.BlockSpec((None, None, C5, gg_tile), lambda b, a, t: (b, a, 0, t)),
        compiler_params=pltpu.CompilerParams(
            dimension_semantics=("parallel", "parallel", "parallel")),
    )(x4)

    # Module semantics require a (B, A*GG, C5) output.  Doing this permute as a
    # single XLA transpose (full-width tiles) is layout plumbing and is far
    # cheaper than lane-sparse (8-of-128 lane) in-kernel stores for small C5.
    output = jnp.transpose(out, (0, 1, 3, 2)).reshape(B, A * GG, C5)
    # TODO(synk): training branch (utils.build_targets + MSE/BCE losses) is not
    # implemented; the reference forward with targets=None returns loss = 0.
    return output, 0


def _reference_forward(x, anchors, image_size, num_classes):
    """Pure-JAX transcription of the PyTorch forward (targets=None) for checking."""
    B, C, G, _ = x.shape
    A = len(anchors)
    C5 = num_classes + 5
    stride = float(image_size) / float(G)
    pred = jnp.transpose(x.astype(jnp.float32).reshape(B, A, C5, G, G),
                         (0, 1, 3, 4, 2))
    bx = jax.nn.sigmoid(pred[..., 0])
    by = jax.nn.sigmoid(pred[..., 1])
    bw = pred[..., 2]
    bh = pred[..., 3]
    conf = jax.nn.sigmoid(pred[..., 4])
    cls = jax.nn.sigmoid(pred[..., 5:])
    cx = jnp.arange(G, dtype=jnp.float32).reshape(1, 1, 1, G)
    cy = jnp.arange(G, dtype=jnp.float32).reshape(1, 1, G, 1)
    sa = jnp.asarray(anchors, jnp.float32) / stride
    aw = sa[:, 0].reshape(1, A, 1, 1)
    ah = sa[:, 1].reshape(1, A, 1, 1)
    boxes = jnp.stack(
        [bx + cx, by + cy, jnp.exp(bw) * aw, jnp.exp(bh) * ah], axis=-1)
    out = jnp.concatenate(
        [boxes.reshape(B, -1, 4) * stride,
         conf.reshape(B, -1, 1),
         cls.reshape(B, -1, num_classes)],
        axis=-1)
    return out


if __name__ == "__main__":
    # Small deterministic setup consistent with the module:
    # num_anchors=3, num_classes=3 -> channels = 3 * (3 + 5) = 24
    anchors = ((10.0, 13.0), (16.0, 30.0), (33.0, 23.0))
    num_classes = 3
    image_size = 32
    B, G = 2, 8
    C = len(anchors) * (num_classes + 5)

    key = jax.random.PRNGKey(0)
    x = jax.random.normal(key, (B, C, G, G), dtype=jnp.float32)

    output, loss = yolo_detection_forward(x, anchors, image_size, num_classes)
    output = jax.block_until_ready(output)

    ref = _reference_forward(x, anchors, image_size, num_classes)
    assert output.shape == (B, len(anchors) * G * G, num_classes + 5)
    assert jnp.allclose(output, ref, atol=1e-4, rtol=1e-4), "mismatch vs reference"
    assert loss == 0

    print("KERNEL_OK")
</pallas_src>

<mosaic_0001>
module attributes {stable_mosaic.version = 11 : i64} {
  func.func @_yolo_detection_kernel(%arg0: i32, %arg1: i32, %arg2: i32, %arg3: memref<1x1x8x64xf32, #tpu.memory_space<vmem>>, %arg4: memref<1x1x8x64xf32, #tpu.memory_space<vmem>>) attributes {dimension_semantics = [#tpu.dimension_semantics<parallel>, #tpu.dimension_semantics<parallel>, #tpu.dimension_semantics<parallel>], iteration_bounds = array<i64: 2, 3, 1>, scalar_prefetch = 0 : i64, scratch_operands = 0 : i64, tpu.core_type = #tpu.core_type<tc>, window_params = [{transform_indices = @transform_0, window_bounds = array<i64: 1, 1, 8, 64>}, {transform_indices = @transform_1, window_bounds = array<i64: 1, 1, 8, 64>}]} {
    %c1_i32 = arith.constant 1 : i32
    %0 = arith.cmpi eq, %arg1, %c1_i32 : i32
    %cst = arith.constant 1.600000e+01 : f32
    %cst_0 = arith.constant 1.000000e+01 : f32
    %1 = arith.select %0, %cst, %cst_0 : f32
    %cst_1 = arith.constant 3.000000e+01 : f32
    %cst_2 = arith.constant 1.300000e+01 : f32
    %2 = arith.select %0, %cst_1, %cst_2 : f32
    %c2_i32 = arith.constant 2 : i32
    %3 = arith.cmpi eq, %arg1, %c2_i32 : i32
    %cst_3 = arith.constant 3.300000e+01 : f32
    %4 = arith.select %3, %cst_3, %1 : f32
    %cst_4 = arith.constant 2.300000e+01 : f32
    %5 = arith.select %3, %cst_4, %2 : f32
    %6 = tpu.iota {dimensions = array<i32: 1>} : vector<1x64xi32>
    %7 = arith.sitofp %6 : vector<1x64xi32> to vector<1x64xf32>
    %8 = arith.sitofp %arg2 : i32 to f32
    %cst_5 = arith.constant 6.400000e+01 : f32
    %9 = arith.mulf %cst_5, %8 : f32
    %10 = vector.broadcast %9 : f32 to vector<1x64xf32>
    %11 = arith.addf %7, %10 : vector<1x64xf32>
    %cst_6 = arith.constant 5.000000e-01 : f32
    %12 = vector.broadcast %cst_6 : f32 to vector<1x64xf32>
    %13 = arith.addf %11, %12 : vector<1x64xf32>
    %cst_7 = arith.constant 1.250000e-01 : f32
    %14 = vector.broadcast %cst_7 : f32 to vector<1x64xf32>
    %15 = arith.mulf %13, %14 : vector<1x64xf32>
    %16 = math.floor %15 : vector<1x64xf32>
    %cst_8 = arith.constant 8.000000e+00 : f32
    %17 = vector.broadcast %cst_8 : f32 to vector<1x64xf32>
    %18 = arith.mulf %16, %17 : vector<1x64xf32>
    %19 = arith.subf %11, %18 : vector<1x64xf32>
    %c0 = arith.constant 0 : index
    %c0_9 = arith.constant 0 : index
    %c0_10 = arith.constant 0 : index
    %c0_11 = arith.constant 0 : index
    %20 = vector.load %arg3[%c0, %c0_9, %c0_10, %c0_11] : memref<1x1x8x64xf32, #tpu.memory_space<vmem>>, vector<1x1x2x64xf32>
    %21 = vector.shape_cast %20 : vector<1x1x2x64xf32> to vector<2x64xf32>
    %cst_12 = arith.constant 0.000000e+00 : f32
    %22 = vector.broadcast %cst_12 : f32 to vector<2x64xf32>
    %23 = arith.subf %22, %21 : vector<2x64xf32>
    %24 = math.exp %23 : vector<2x64xf32>
    %cst_13 = arith.constant 1.000000e+00 : f32
    %25 = vector.broadcast %cst_13 : f32 to vector<2x64xf32>
    %26 = arith.addf %25, %24 : vector<2x64xf32>
    %cst_14 = arith.constant 1.000000e+00 : f32
    %27 = vector.broadcast %cst_14 : f32 to vector<2x64xf32>
    %28 = arith.divf %27, %26 : vector<2x64xf32>
    %29 = vector.extract_strided_slice %28 {offsets = [0, 0], sizes = [1, 64], strides = [1, 1]} : vector<2x64xf32> to vector<1x64xf32>
    %30 = arith.addf %29, %19 : vector<1x64xf32>
    %cst_15 = arith.constant 4.000000e+00 : f32
    %31 = vector.broadcast %cst_15 : f32 to vector<1x64xf32>
    %32 = arith.mulf %30, %31 : vector<1x64xf32>
    %c0_16 = arith.constant 0 : index
    %c0_17 = arith.constant 0 : index
    %c0_18 = arith.constant 0 : index
    %c0_19 = arith.constant 0 : index
    %33 = vector.load %arg4[%c0_16, %c0_17, %c0_18, %c0_19] : memref<1x1x8x64xf32, #tpu.memory_space<vmem>>, vector<1x1x1x64xf32>
    %34 = vector.shape_cast %33 : vector<1x1x1x64xf32> to vector<1x64xf32>
    %35 = vector.shape_cast %32 : vector<1x64xf32> to vector<1x1x1x64xf32>
    tpu.vector_store %arg4[%c0_16, %c0_17, %c0_18, %c0_19], %35 {strides = array<i32>} : memref<1x1x8x64xf32, #tpu.memory_space<vmem>>, vector<1x1x1x64xf32>,
    %36 = vector.extract_strided_slice %28 {offsets = [1, 0], sizes = [1, 64], strides = [1, 1]} : vector<2x64xf32> to vector<1x64xf32>
    %37 = arith.addf %36, %16 : vector<1x64xf32>
    %cst_20 = arith.constant 4.000000e+00 : f32
    %38 = vector.broadcast %cst_20 : f32 to vector<1x64xf32>
    %39 = arith.mulf %37, %38 : vector<1x64xf32>
    %c0_21 = arith.constant 0 : index
    %c0_22 = arith.constant 0 : index
    %c1 = arith.constant 1 : index
    %c0_23 = arith.constant 0 : index
    %40 = vector.load %arg4[%c0_21, %c0_22, %c1, %c0_23] : memref<1x1x8x64xf32, #tpu.memory_space<vmem>>, vector<1x1x1x64xf32>
    %41 = vector.shape_cast %40 : vector<1x1x1x64xf32> to vector<1x64xf32>
    %42 = vector.shape_cast %39 : vector<1x64xf32> to vector<1x1x1x64xf32>
    tpu.vector_store %arg4[%c0_21, %c0_22, %c1, %c0_23], %42 {strides = array<i32>} : memref<1x1x8x64xf32, #tpu.memory_space<vmem>>, vector<1x1x1x64xf32>,
    %c0_24 = arith.constant 0 : index
    %c0_25 = arith.constant 0 : index
    %c2 = arith.constant 2 : index
    %c0_26 = arith.constant 0 : index
    %43 = vector.load %arg3[%c0_24, %c0_25, %c2, %c0_26] : memref<1x1x8x64xf32, #tpu.memory_space<vmem>>, vector<1x1x2x64xf32>
    %44 = vector.shape_cast %43 : vector<1x1x2x64xf32> to vector<2x64xf32>
    %45 = math.exp %44 : vector<2x64xf32>
    %46 = vector.extract_strided_slice %45 {offsets = [0, 0], sizes = [1, 64], strides = [1, 1]} : vector<2x64xf32> to vector<1x64xf32>
    %47 = vector.broadcast %4 : f32 to vector<1x64xf32>
    %48 = arith.mulf %46, %47 : vector<1x64xf32>
    %c0_27 = arith.constant 0 : index
    %c0_28 = arith.constant 0 : index
    %c2_29 = arith.constant 2 : index
    %c0_30 = arith.constant 0 : index
    %49 = vector.load %arg4[%c0_27, %c0_28, %c2_29, %c0_30] : memref<1x1x8x64xf32, #tpu.memory_space<vmem>>, vector<1x1x1x64xf32>
    %50 = vector.shape_cast %49 : vector<1x1x1x64xf32> to vector<1x64xf32>
    %51 = vector.shape_cast %48 : vector<1x64xf32> to vector<1x1x1x64xf32>
    tpu.vector_store %arg4[%c0_27, %c0_28, %c2_29, %c0_30], %51 {strides = array<i32>} : memref<1x1x8x64xf32, #tpu.memory_space<vmem>>, vector<1x1x1x64xf32>,
    %52 = vector.extract_strided_slice %45 {offsets = [1, 0], sizes = [1, 64], strides = [1, 1]} : vector<2x64xf32> to vector<1x64xf32>
    %53 = vector.broadcast %5 : f32 to vector<1x64xf32>
    %54 = arith.mulf %52, %53 : vector<1x64xf32>
    %c0_31 = arith.constant 0 : index
    %c0_32 = arith.constant 0 : index
    %c3 = arith.constant 3 : index
    %c0_33 = arith.constant 0 : index
    %55 = vector.load %arg4[%c0_31, %c0_32, %c3, %c0_33] : memref<1x1x8x64xf32, #tpu.memory_space<vmem>>, vector<1x1x1x64xf32>
    %56 = vector.shape_cast %55 : vector<1x1x1x64xf32> to vector<1x64xf32>
    %57 = vector.shape_cast %54 : vector<1x64xf32> to vector<1x1x1x64xf32>
    tpu.vector_store %arg4[%c0_31, %c0_32, %c3, %c0_33], %57 {strides = array<i32>} : memref<1x1x8x64xf32, #tpu.memory_space<vmem>>, vector<1x1x1x64xf32>,
    %c0_34 = arith.constant 0 : index
    %c0_35 = arith.constant 0 : index
    %c4 = arith.constant 4 : index
    %c0_36 = arith.constant 0 : index
    %58 = vector.load %arg3[%c0_34, %c0_35, %c4, %c0_36] : memref<1x1x8x64xf32, #tpu.memory_space<vmem>>, vector<1x1x4x64xf32>
    %59 = vector.shape_cast %58 : vector<1x1x4x64xf32> to vector<4x64xf32>
    %cst_37 = arith.constant 0.000000e+00 : f32
    %60 = vector.broadcast %cst_37 : f32 to vector<4x64xf32>
    %61 = arith.subf %60, %59 : vector<4x64xf32>
    %62 = math.exp %61 : vector<4x64xf32>
    %cst_38 = arith.constant 1.000000e+00 : f32
    %63 = vector.broadcast %cst_38 : f32 to vector<4x64xf32>
    %64 = arith.addf %63, %62 : vector<4x64xf32>
    %cst_39 = arith.constant 1.000000e+00 : f32
    %65 = vector.broadcast %cst_39 : f32 to vector<4x64xf32>
    %66 = arith.divf %65, %64 : vector<4x64xf32>
    %c0_40 = arith.constant 0 : index
    %c0_41 = arith.constant 0 : index
    %c4_42 = arith.constant 4 : index
    %c0_43 = arith.constant 0 : index
    %67 = vector.load %arg4[%c0_40, %c0_41, %c4_42, %c0_43] : memref<1x1x8x64xf32, #tpu.memory_space<vmem>>, vector<1x1x4x64xf32>
    %68 = vector.shape_cast %67 : vector<1x1x4x64xf32> to vector<4x64xf32>
    %69 = vector.shape_cast %66 : vector<4x64xf32> to vector<1x1x4x64xf32>
    tpu.vector_store %arg4[%c0_40, %c0_41, %c4_42, %c0_43], %69 {strides = array<i32>} : memref<1x1x8x64xf32, #tpu.memory_space<vmem>>, vector<1x1x4x64xf32>,
    return
  }
  func.func @transform_0(%arg0: i32, %arg1: i32, %arg2: i32) -> (i32, i32, i32, i32) {
    %c0_i32 = arith.constant 0 : i32
    %c0_i32_0 = arith.constant 0 : i32
    return %arg0, %arg1, %c0_i32, %arg2 : i32, i32, i32, i32
  }
  func.func @transform_1(%arg0: i32, %arg1: i32, %arg2: i32) -> (i32, i32, i32, i32) {
    %c0_i32 = arith.constant 0 : i32
    %c0_i32_0 = arith.constant 0 : i32
    return %arg0, %arg1, %c0_i32, %arg2 : i32, i32, i32, i32
  }
}

</mosaic_0001>

<llo_original>
// kernel: tpu_custom_call.1
$region0: #{tpu_custom_call.1}
  #allocation0 [shape = 'u32[]', space=smem, size = 0x4, offset = 0x4, fixed_abs, tag = 'smem constant byte address 0x4 - core index']
  #allocation1 [shape = 'u32[144,128]{1,0:T(1,128)}', space=vmem, size = 0x12000, scoped, tag = 'internal scratch']
  %s0 = inlined_call_operand.hbm [shape: f32[2,3,8,64], index: 0, kind: input, shape index: {}]
  %s1 = inlined_call_operand.hbm [shape: f32[2,3,8,64], index: 1, kind: output, shape index: {}]
  %s2 = sld [smem:[#allocation0]]
  $region41: #{tpu_custom_call.1} parent=0
    _
  %s4 = ssub.s32 1, %s2
  %s5 = scalar_select 0, %s4, %s2
  $region1: #{tpu_custom_call.1} parent=0
    #allocation2 [shape = 'u8[8192]{0}', space=vmem, size = 0x2000, scoped, tag = 'input window, operand 0']
    #allocation3 [shape = 's32[2]{0}', space=sflag, size = 0x8, scoped, tag = 'scoped memory for tpu_custom_call.1']
    #allocation4 [shape = 's32[2]{0}', space=sflag, size = 0x8, scoped, tag = 'scoped memory for tpu_custom_call.1']
    #allocation5 [shape = 'u8[8192]{0}', space=vmem, size = 0x2000, scoped, tag = 'output window, operand 0']
    %6 = vsyncpa [#allocation3], 0
    %s7 = scalar_lea.sflag [#allocation3], 1
    %8 = vsyncpa %s7, 0
    %9 = vsyncpa [#allocation4], 0
    %s10 = scalar_lea.sflag [#allocation4], 1
    %11 = vsyncpa %s10, 0
    loop: start=0, step=1, limit=8
    $region2: #{tpu_custom_call.1} parent=1 // loop_pre_header
      _
    $region3: #{tpu_custom_call.1} parent=1 // loop_header
      %s13 = sphi 0, %s17
      %p14 = scmp.ge.s32.totalorder %s13, 8
      %s20 = sphi 0, %s39
      %s21 = sphi 0, %s35
      %s22 = sphi 0, %s31
      %s23 = sphi 0, %s20
      %s24 = sphi 0, %s21
      %s25 = sphi 0, %s22
      %s26 = sphi 0, %s23
      %s27 = sphi 0, %s24
      %s28 = sphi 0, %s25
      %s46 = sphi 0, %s48
      %s49 = sphi 0, %s46
      %s50 = sphi 0, %s49
      %s66 = sphi 0, %s50
      %s76 = sphi 0, %s78
      %s79 = sphi 0, %s76
      %s80 = sphi 0, %s79
      %s96 = sphi 0, %s80
    $region4: #{tpu_custom_call.1} parent=1 // loop_header_branch
      %16 = sbr.rel (%p14) target = $region8
    $region5: #{tpu_custom_call.1} parent=1 // loop_body
      %s18 = ssub.s32 %s13, 1
      %s19 = ssub.s32 %s13, 2
      %s29 = sadd.s32 1, %s22
      %p30 = scmp.ge.s32.totalorder %s29, 1
      %s31 = scalar_select %p30, 0, %s29
      %s32 = sadd.s32 1, %s21
      %s33 = scalar_select %p30, %s32, %s21
      %p34 = scmp.ge.s32.totalorder %s33, 3
      %s35 = scalar_select %p34, 0, %s33
      %s36 = sadd.s32 1, %s20
      %s37 = scalar_select %p34, %s36, %s20
      %p38 = scmp.ge.s32.totalorder %s37, 2
      %s39 = scalar_select %p38, 0, %s37
      %s40 = ssub.s32 %s20, %s39
      %s41 = ssub.s32 %s21, %s35
      %s42 = sor.u32 %s40, %s41
      %s43 = ssub.s32 %s22, %s31
      %s44 = sor.u32 %s42, %s43
      %p45 = scmp.eq.s32.totalorder %s44, 0
      %s47 = sadd.s32 %s46, 1
      %s48 = scalar_select %p45, %s46, %s47
      %p51 = pneg %p45
      %p52 = scmp.eq.s32.totalorder %s13, 5
      %p53 = por %p51, %p52
      %p54 = scmp.ne.s32.totalorder %s46, %s49
      %p55 = scmp.eq.s32.totalorder %s13, 0
      %p56 = por %p54, %p55
      %p57 = scmp.ne.s32.totalorder %s46, %s49
      %p58 = scmp.eq.s32.totalorder %s18, 5
      %p59 = por %p57, %p58
      %p60 = scmp.ne.s32.totalorder %s49, %s50
      %p61 = scmp.eq.s32.totalorder %s18, 0
      %p62 = por %p60, %p61
      %p63 = scmp.ne.s32.totalorder %s49, %s50
      %p64 = scmp.eq.s32.totalorder %s19, 5
      %p65 = por %p63, %p64
      %p67 = scmp.ne.s32.totalorder %s50, %s66
      %p68 = scmp.eq.s32.totalorder %s19, 0
      %p69 = por %p67, %p68
      %s70 = ssub.s32 %s20, %s39
      %s71 = ssub.s32 %s21, %s35
      %s72 = sor.u32 %s70, %s71
      %s73 = ssub.s32 %s22, %s31
      %s74 = sor.u32 %s72, %s73
      %p75 = scmp.eq.s32.totalorder %s74, 0
      %s77 = sadd.s32 %s76, 1
      %s78 = scalar_select %p75, %s76, %s77
      %p81 = pneg %p75
      %p82 = scmp.eq.s32.totalorder %s13, 5
      %p83 = por %p81, %p82
      %p84 = scmp.ne.s32.totalorder %s76, %s79
      %p85 = scmp.eq.s32.totalorder %s13, 0
      %p86 = por %p84, %p85
      %p87 = scmp.ne.s32.totalorder %s76, %s79
      %p88 = scmp.eq.s32.totalorder %s18, 5
      %p89 = por %p87, %p88
      %p90 = scmp.ne.s32.totalorder %s79, %s80
      %p91 = scmp.eq.s32.totalorder %s18, 0
      %p92 = por %p90, %p91
      %p93 = scmp.ne.s32.totalorder %s79, %s80
      %p94 = scmp.eq.s32.totalorder %s19, 5
      %p95 = por %p93, %p94
      %p97 = scmp.ne.s32.totalorder %s80, %s96
      %p98 = scmp.eq.s32.totalorder %s19, 0
      %p99 = por %p97, %p98
      %p100 = scmp.le.s32.totalorder 1, %s13
      %p101 = scmp.lt.s32.totalorder %s13, 7
      %p102 = pnand %p100, %p101
      %p103 = pneg %p102
      // Predicated region
      $region9: #{tpu_custom_call.1} parent=5 // pred_check
        _
      $region10: #{tpu_custom_call.1} parent=5 // pred_check_branch
        %105 = sbr.rel (%p102) target = $region12
      $region11: #{tpu_custom_call.1} parent=5 // pred_region
        %s106 = ssub.s32 %s13, 1
      $region12: #{tpu_custom_call.1} parent=5 // pred_fallthru
        _
      %p107 = scmp.lt.s32.totalorder %s13, 6
      // Predicated region
      $region13: #{tpu_custom_call.1} parent=5 // pred_check
        %p108 = pneg %p107
      $region14: #{tpu_custom_call.1} parent=5 // pred_check_branch
        %110 = sbr.rel (%p108) target = $region16
      $region15: #{tpu_custom_call.1} parent=5 // pred_region
        // Predicated region
        $region17: #{tpu_custom_call.1} parent=15 // pred_check
          %p111 = pneg %p56
        $region18: #{tpu_custom_call.1} parent=15 // pred_check_branch
          %113 = sbr.rel (%p111) target = $region20
        $region19: #{tpu_custom_call.1} parent=15 // pred_region
          %s114 = sand.u32 %s46, 1
          %s115 = scalar_lea.sflag [#allocation3], %s114
          %s116 = sand.u32 %s46, 1
          %s117 = smul.addr %s116, 8
          %s118 = scalar_lea.vmem [#allocation2], %s117
          %s120 = ssub.s32 128, 128
          %121 = vsyncadd %s115, %s120
          %s122 = sadd.s32 %s22, %s21
          %s123 = smul.addr %s20, 3
          %s124 = sadd.s32 %s122, %s123
          %s125 = smul.addr %s124, 128
          %s126 = scalar_lea.hbm %s0, %s125
          %s128 = sshll.u32 %s118, 4
          %s129 = int_to_ptr.vmem [resolvable:$true] %s128
          %131 = dma.hbm_to_vmem [thread:$0]  %s126, 128, %s129, %s115
        $region20: #{tpu_custom_call.1} parent=15 // pred_fallthru
          _
      $region16: #{tpu_custom_call.1} parent=5 // pred_fallthru
        _
      %p132 = scmp.le.s32.totalorder 1, %s13
      %p133 = scmp.lt.s32.totalorder %s13, 7
      %p134 = pnand %p132, %p133
      %p135 = pneg %p134
      // Predicated region
      $region21: #{tpu_custom_call.1} parent=5 // pred_check
        _
      $region22: #{tpu_custom_call.1} parent=5 // pred_check_branch
        %137 = sbr.rel (%p134) target = $region24
      $region23: #{tpu_custom_call.1} parent=5 // pred_region
        %s138 = ssub.s32 %s13, 1
        %s139 = sand.u32 %s49, 1
        %s140 = scalar_lea.sflag [#allocation3], %s139
        %s141 = sand.u32 %s49, 1
        %s142 = smul.addr %s141, 8
        %s143 = scalar_lea.vmem [#allocation2], %s142
        // Predicated region
        $region25: #{tpu_custom_call.1} parent=23 // pred_check
          %p144 = pneg %p62
        $region26: #{tpu_custom_call.1} parent=23 // pred_check_branch
          %146 = sbr.rel (%p144) target = $region28
        $region27: #{tpu_custom_call.1} parent=23 // pred_region
          %147 = dma.done %s140, 128
        $region28: #{tpu_custom_call.1} parent=23 // pred_fallthru
          _
        %s148 = sand.u32 %s49, 1
        %s149 = scalar_lea.sflag [#allocation3], %s148
        %s150 = sand.u32 %s49, 1
        %s151 = smul.addr %s150, 8
        %s152 = scalar_lea.vmem [#allocation2], %s151
        %p153 = pneg %p62
        %p154 = pneg %p59
        %p155 = pneg %p92
        %p156 = pneg %p89
        %s157 = sand.u32 %s79, 1
        %s158 = scalar_lea.sflag [#allocation4], %s157
        %s159 = sand.u32 %s79, 1
        %s160 = smul.addr %s159, 8
        %s161 = scalar_lea.vmem [#allocation5], %s160
        %p162 = scmp.eq.s32.totalorder %s24, 1
        %s163 = scalar_select %p162, 16.0, 10.0
        %s164 = scalar_select %p162, 30.0, 13.0
        %p165 = scmp.eq.s32.totalorder %s24, 2
        %s166 = scalar_select %p165, 33.0, %s163
        %s167 = scalar_select %p165, 23.0, %s164
        %v168 = vlaneseq
        %v169 = vand.u32 %v168, 127
        %v170 = vcvt.s32.f32 %v169
        %s171 = scvt.s32.f32 %s25
        %s172 = smul.f32 %s171, 64.0
        %v173 = vstv %s172
        %v174 = vadd.f32 %v170, %v173
        %v175 = vadd.f32 %v174, 0.5
        %v176 = vmul.f32 %v175, 0.125
        %v177 = vfloor.f32 %v176
        %v178 = vmul.f32 %v177, 8.0
        %v179 = vsub.f32 %v174, %v178
        %v180 = vld [vmem:[%s143] sm:$0x3]
        %v181 = vsub.f32 0.0, %v180
        %v182 = vmul.f32 %v181, 1.442695
        %v183 = vpow.pop %v182
        %v184 = vadd.f32 %v183, 1.0
        %v185 = vrcp.pop %v184
        %v186 = vmul.f32 1.0, %v185
        %v187 = vadd.f32 %v186, %v179
        %v188 = vmul.f32 %v187, 4.0
        %vm189 = vcmask 516096
        %190 = vst.msk [vmem:[%s161] sm:$0x1] %vm189, %v188
        %v191 = vadd.f32 %v186, %v177
        %v192 = vmul.f32 %v191, 4.0
        %vm193 = vcmask 517121
        %194 = vst.msk [vmem:[%s161] sm:$0x2] %vm193, %v192
        %v195 = vld [vmem:[%s143 + $0x2] sm:$0x3]
        %v196 = vmul.f32 %v195, 1.442695
        %v197 = vpow.pop %v196
        %v198 = vstv %s166
        %v199 = vmul.f32 %v197, %v198
        %200 = vst.msk [vmem:[%s161 + $0x2] sm:$0x1] %vm189, %v199
        %v201 = vstv %s167
        %v202 = vmul.f32 %v197, %v201
        %203 = vst.msk [vmem:[%s161 + $0x2] sm:$0x2] %vm193, %v202
        %v204 = vld [vmem:[%s143 + $0x4] sm:$0xf]
        %v205 = vsub.f32 0.0, %v204
        %v206 = vmul.f32 %v205, 1.442695
        %v207 = vpow.pop %v206
        %v208 = vadd.f32 %v207, 1.0
        %v209 = vrcp.pop %v208
        %v210 = vmul.f32 1.0, %v209
        %vm211 = vcmask 519168
        %212 = vst.msk [vmem:[%s161 + $0x4] sm:$0xf] %vm211, %v210
        %s213 = sand.u32 %s79, 1
        %s214 = scalar_lea.sflag [#allocation4], %s213
        %s215 = sand.u32 %s79, 1
        %s216 = smul.addr %s215, 8
        %s217 = scalar_lea.vmem [#allocation5], %s216
        // Predicated region
        $region29: #{tpu_custom_call.1} parent=23 // pred_check
          %p218 = pneg %p89
        $region30: #{tpu_custom_call.1} parent=23 // pred_check_branch
          %220 = sbr.rel (%p218) target = $region32
        $region31: #{tpu_custom_call.1} parent=23 // pred_region
          %s222 = ssub.s32 128, 128
          %223 = vsyncadd %s214, %s222
          %s224 = sadd.s32 %s25, %s24
          %s225 = smul.addr %s23, 3
          %s226 = sadd.s32 %s224, %s225
          %s227 = smul.addr %s226, 128
          %s228 = scalar_lea.hbm %s1, %s227
          %s230 = sshll.u32 %s217, 4
          %s231 = int_to_ptr.vmem [resolvable:$true] %s230
          %233 = dma.vmem_to_hbm [thread:$0]  %s231, 128, %s228, %s214
        $region32: #{tpu_custom_call.1} parent=23 // pred_fallthru
          _
      $region24: #{tpu_custom_call.1} parent=5 // pred_fallthru
        _
      %p234 = scmp.le.s32.totalorder 2, %s13
      // Predicated region
      $region33: #{tpu_custom_call.1} parent=5 // pred_check
        %p235 = pneg %p234
      $region34: #{tpu_custom_call.1} parent=5 // pred_check_branch
        %237 = sbr.rel (%p235) target = $region36
      $region35: #{tpu_custom_call.1} parent=5 // pred_region
        %s238 = ssub.s32 %s13, 2
        // Predicated region
        $region37: #{tpu_custom_call.1} parent=35 // pred_check
          %p239 = pneg %p95
        $region38: #{tpu_custom_call.1} parent=35 // pred_check_branch
          %241 = sbr.rel (%p239) target = $region40
        $region39: #{tpu_custom_call.1} parent=35 // pred_region
          %s242 = sand.u32 %s80, 1
          %s243 = scalar_lea.sflag [#allocation4], %s242
          %s244 = sand.u32 %s80, 1
          %s245 = smul.addr %s244, 8
          %s246 = scalar_lea.vmem [#allocation5], %s245
          %247 = dma.done %s243, 128
        $region40: #{tpu_custom_call.1} parent=35 // pred_fallthru
          _
      $region36: #{tpu_custom_call.1} parent=5 // pred_fallthru
        _
    $region6: #{tpu_custom_call.1} parent=1 // loop_footer
      %s17 = sadd.s32 1, %s13
    $region7: #{tpu_custom_call.1} parent=1 // loop_footer_branch
      %12 = sbr.rel target = $region3
    $region8: #{tpu_custom_call.1} parent=1 // loop_exit
      _
    %248 = vsyncpa [#allocation3], 1
    %s249 = scalar_lea.sflag [#allocation3], 1
    %250 = vsyncpa %s249, 1
    %251 = vsyncpa [#allocation4], 1
    %s252 = scalar_lea.sflag [#allocation4], 1
    %253 = vsyncpa %s252, 1

</llo_original>
